<compile_context>
chip_gen: v7x
topology: tpu7x:2x2x1
jax: 0.10.0
libtpu: 0.0.40
codegen_flags: <defaults>
</compile_context>

<pallas_src>
import jax
import jax.numpy as jnp
from jax.experimental import pallas as pl
from jax.experimental.pallas import tpu as pltpu


# ----------------------------------------------------------------------------
# Pallas kernel: entire Transformer2.forward hot path
# ----------------------------------------------------------------------------
def transformer2_kernel(
    p_ref,      # (bb, 3)       f32
    enc_ref,    # (bb, 192)     f32
    g_ref,      # (bb, 32)      f32
    l_ref,      # (bb, S, 116)  f32
    w1pad_ref,  # (192, 32)     f32  W1.T in cols 0:16, zeros elsewhere
    wppad_ref,  # (3, 32)       f32  Wp.T in cols 16:32, zeros elsewhere
    bxp_ref,    # (1, 32)       f32  [b1 | bp]
    wlt_ref,    # (116, 32)     f32  Wl.T
    bl_ref,     # (1, 32)       f32
    w2_ref,     # (2, 32)       f32  W2 (row-major, used for transposed output)
    b2t_ref,    # (2, 1)        f32
    out_ref,    # (2, bb)       f32  lane-dense transposed output tile
):
    # In-kernel reduction of l over the sequence axis (no HBM lsum round-trip).
    s_len = l_ref.shape[1]
    lsum = l_ref[:, 0, :]
    for s in range(1, s_len):                      # static unroll, VPU adds
        lsum = lsum + l_ref[:, s, :]

    # cat(dense_1(enc), fc_p(p)) via two column-padded dots (no lane concat).
    xp = (jnp.dot(enc_ref[...], w1pad_ref[...], preferred_element_type=jnp.float32)
          + jnp.dot(p_ref[...], wppad_ref[...], preferred_element_type=jnp.float32)
          + bxp_ref[...])                                        # (bb, 32)

    # l projection.
    lproj = (jnp.dot(lsum, wlt_ref[...], preferred_element_type=jnp.float32)
             + bl_ref[...])                                      # (bb, 32)

    # Gated mix (f32, VPU).
    gate = g_ref[...]
    f_o = gate * xp + (1.0 - gate) * lproj                       # (bb, 32)

    # dense_2, emitted transposed so the output tile is lane-dense (2, bb);
    # the (bb,32)->(32,bb) transpose rides the otherwise-idle XLU slot.
    out_t = (jnp.dot(w2_ref[...], f_o.T, preferred_element_type=jnp.float32)
             + b2t_ref[...])                                     # (2, bb)
    out_ref[...] = out_t.astype(out_ref.dtype)


# ----------------------------------------------------------------------------
# Parameters (deterministic init, PyTorch nn.Linear-style uniform)
# ----------------------------------------------------------------------------
def init_params(key):
    def linear(key, in_f, out_f):
        kw, kb = jax.random.split(key)
        bound = 1.0 / jnp.sqrt(jnp.float32(in_f))
        w = jax.random.uniform(kw, (out_f, in_f), jnp.float32, -bound, bound)
        b = jax.random.uniform(kb, (out_f,), jnp.float32, -bound, bound)
        return w, b

    k1, k2, k3, k4 = jax.random.split(key, 4)
    return {
        "dense_1": linear(k1, 192, 16),   # Linear(192, 16)
        "dense_2": linear(k2, 32, 2),     # Linear(32, 2)
        "fc_p":    linear(k3, 3, 16),     # Linear(3, 16)
        "l":       linear(k4, 116, 32),   # Linear(116, 32)
    }


# ----------------------------------------------------------------------------
# One-time weight packing (hoisted out of the per-call path)
# ----------------------------------------------------------------------------
def prepare_params(params):
    w1, b1 = params["dense_1"]   # (16, 192), (16,)
    w2, b2 = params["dense_2"]   # (2, 32),   (2,)
    wp, bp = params["fc_p"]      # (16, 3),   (16,)
    wl, bl = params["l"]         # (32, 116), (32,)

    # Column-padded projection weights so the two dots write disjoint halves of
    # the same 32-wide output -> cat(x, pp) is a plain VPU add, no concat.
    w1pad = jnp.zeros((192, 32), jnp.float32).at[:, :16].set(w1.T)
    wppad = jnp.zeros((3, 32), jnp.float32).at[:, 16:].set(wp.T)
    bxp = jnp.concatenate([b1, bp])[None, :]          # (1, 32)

    return {
        "w1pad": w1pad,                               # (192, 32)
        "wppad": wppad,                               # (3, 32)
        "bxp":   bxp,                                 # (1, 32)
        "wlt":   wl.T.astype(jnp.float32),            # (116, 32)
        "bl":    bl[None, :].astype(jnp.float32),     # (1, 32)
        "w2":    w2.astype(jnp.float32),              # (2, 32)
        "b2t":   b2[:, None].astype(jnp.float32),     # (2, 1)
    }


# ----------------------------------------------------------------------------
# Batch-tile selection: VMEM-budget-driven, remainder-safe, megacore-aware
# ----------------------------------------------------------------------------
def _pick_block_b(B, S):
    # Lane-padded f32 bytes per batch row resident in VMEM (inputs + output).
    per_row = 4 * (S * 128 + 256 + 128 + 128) + 16
    budget = 10 * 1024 * 1024                 # per pipeline stage (x2 buffers)
    cap = max(8, min(8192, (budget // per_row) // 8 * 8))
    if B <= 512 and B <= cap:
        return max(8, -(-B // 8) * 8)         # whole (8-padded) batch, one tile
    cap128 = max(128, cap // 128 * 128)
    # Keep >= 2 grid steps so both v7x TensorCores get work.
    half = max(128, (-(-B // 256)) * 128)     # ~ceil(B/2) rounded up to 128
    return min(cap128, half)


# ----------------------------------------------------------------------------
# Forward wrapper (jit this together with the caller)
# ----------------------------------------------------------------------------
def transformer2_forward(prepared, p, enc_inputs, g, f, l):
    # NOTE: `f` is unused by Transformer2.forward; accepted for signature parity.
    del f
    B = enc_inputs.shape[0]
    S = l.shape[1]

    block_b = _pick_block_b(B, S)
    Bp = -(-B // block_b) * block_b           # pad batch up to a tile multiple
    if Bp != B:
        pad = Bp - B
        p = jnp.pad(p, ((0, pad), (0, 0)))
        enc_inputs = jnp.pad(enc_inputs, ((0, pad), (0, 0)))
        g = jnp.pad(g, ((0, pad), (0, 0)))
        l = jnp.pad(l, ((0, pad), (0, 0), (0, 0)))

    grid = (Bp // block_b,)
    batch_spec = lambda c: pl.BlockSpec((block_b, c), lambda i: (i, 0))
    whole_spec = lambda shape: pl.BlockSpec(shape, lambda i: (0,) * len(shape))

    out_t = pl.pallas_call(
        transformer2_kernel,
        out_shape=jax.ShapeDtypeStruct((2, Bp), jnp.float32),
        grid=grid,
        in_specs=[
            batch_spec(3),                                          # p
            batch_spec(192),                                        # enc
            batch_spec(32),                                         # g
            pl.BlockSpec((block_b, S, 116), lambda i: (i, 0, 0)),   # l
            whole_spec((192, 32)),                                  # w1pad
            whole_spec((3, 32)),                                    # wppad
            whole_spec((1, 32)),                                    # bxp
            whole_spec((116, 32)),                                  # wlt
            whole_spec((1, 32)),                                    # bl
            whole_spec((2, 32)),                                    # w2
            whole_spec((2, 1)),                                     # b2t
        ],
        out_specs=pl.BlockSpec((2, block_b), lambda i: (0, i)),     # lane-dense
        compiler_params=pltpu.CompilerParams(
            dimension_semantics=("parallel",),
            vmem_limit_bytes=40 * 1024 * 1024),
    )(p, enc_inputs, g, l,
      prepared["w1pad"], prepared["wppad"], prepared["bxp"],
      prepared["wlt"], prepared["bl"], prepared["w2"], prepared["b2t"])

    out = out_t.T                              # (Bp, 2) - tiny XLA transpose
    return out[:B] if Bp != B else out


# Pure-JAX reference (mirrors the PyTorch forward literally) for verification.
def transformer2_ref(params, p, enc_inputs, g, f, l):
    w1, b1 = params["dense_1"]
    w2, b2 = params["dense_2"]
    wp, bp = params["fc_p"]
    wl, bl = params["l"]
    x = enc_inputs @ w1.T + b1
    pp = p @ wp.T + bp
    lsum = l.sum(axis=1)
    lproj = lsum @ wl.T + bl
    f_o = g * jnp.concatenate((x, pp), axis=1) + (1.0 - g) * lproj
    return f_o @ w2.T + b2


if __name__ == "__main__":
    key = jax.random.PRNGKey(0)
    kparam, kp, kenc, kg, kf, kl = jax.random.split(key, 6)

    B, S = 8, 8
    params = init_params(kparam)
    prepared = prepare_params(params)          # one-time weight packing

    p = jax.random.normal(kp, (B, 3), jnp.float32)
    enc_inputs = jax.random.normal(kenc, (B, 192), jnp.float32)
    g = jax.random.uniform(kg, (B, 32), jnp.float32)   # gate in [0, 1)
    f = jax.random.normal(kf, (B, 10), jnp.float32)    # unused by forward
    l = jax.random.normal(kl, (B, S, 116), jnp.float32)

    fwd = jax.jit(transformer2_forward)
    out = jax.block_until_ready(fwd(prepared, p, enc_inputs, g, f, l))

    ref = transformer2_ref(params, p, enc_inputs, g, f, l)
    assert out.shape == (B, 2), out.shape
    # All-f32 kernel path: tight tolerance vs. the f32 reference.
    assert jnp.allclose(out, ref, atol=1e-4, rtol=1e-4), (
        float(jnp.max(jnp.abs(out - ref))))

    print("KERNEL_OK")
</pallas_src>

<mosaic_0001>
module attributes {stable_mosaic.version = 11 : i64} {
  func.func @transformer2_kernel(%arg0: i32, %arg1: memref<8x3xf32, #tpu.memory_space<vmem>>, %arg2: memref<8x192xf32, #tpu.memory_space<vmem>>, %arg3: memref<8x32xf32, #tpu.memory_space<vmem>>, %arg4: memref<8x8x116xf32, #tpu.memory_space<vmem>>, %arg5: memref<192x32xf32, #tpu.memory_space<vmem>>, %arg6: memref<3x32xf32, #tpu.memory_space<vmem>>, %arg7: memref<1x32xf32, #tpu.memory_space<vmem>>, %arg8: memref<116x32xf32, #tpu.memory_space<vmem>>, %arg9: memref<1x32xf32, #tpu.memory_space<vmem>>, %arg10: memref<2x32xf32, #tpu.memory_space<vmem>>, %arg11: memref<2x1xf32, #tpu.memory_space<vmem>>, %arg12: memref<2x8xf32, #tpu.memory_space<vmem>>) attributes {dimension_semantics = [#tpu.dimension_semantics<parallel>], iteration_bounds = array<i64: 1>, scalar_prefetch = 0 : i64, scratch_operands = 0 : i64, tpu.core_type = #tpu.core_type<tc>, window_params = [{transform_indices = @transform_0, window_bounds = array<i64: 8, 3>}, {transform_indices = @transform_1, window_bounds = array<i64: 8, 192>}, {transform_indices = @transform_2, window_bounds = array<i64: 8, 32>}, {transform_indices = @transform_3, window_bounds = array<i64: 8, 8, 116>}, {pipeline_mode = #tpu.pipeline_mode<synchronous>, transform_indices = @transform_4, window_bounds = array<i64: 192, 32>}, {pipeline_mode = #tpu.pipeline_mode<synchronous>, transform_indices = @transform_5, window_bounds = array<i64: 3, 32>}, {pipeline_mode = #tpu.pipeline_mode<synchronous>, transform_indices = @transform_6, window_bounds = array<i64: 1, 32>}, {pipeline_mode = #tpu.pipeline_mode<synchronous>, transform_indices = @transform_7, window_bounds = array<i64: 116, 32>}, {pipeline_mode = #tpu.pipeline_mode<synchronous>, transform_indices = @transform_8, window_bounds = array<i64: 1, 32>}, {pipeline_mode = #tpu.pipeline_mode<synchronous>, transform_indices = @transform_9, window_bounds = array<i64: 2, 32>}, {pipeline_mode = #tpu.pipeline_mode<synchronous>, transform_indices = @transform_10, window_bounds = array<i64: 2, 1>}, {transform_indices = @transform_11, window_bounds = array<i64: 2, 8>}]} {
    %c0 = arith.constant 0 : index
    %c0_0 = arith.constant 0 : index
    %c0_1 = arith.constant 0 : index
    %0 = vector.load %arg4[%c0, %c0_0, %c0_1] : memref<8x8x116xf32, #tpu.memory_space<vmem>>, vector<8x1x116xf32>
    %1 = vector.shape_cast %0 : vector<8x1x116xf32> to vector<8x116xf32>
    %c0_2 = arith.constant 0 : index
    %c1 = arith.constant 1 : index
    %c0_3 = arith.constant 0 : index
    %2 = vector.load %arg4[%c0_2, %c1, %c0_3] : memref<8x8x116xf32, #tpu.memory_space<vmem>>, vector<8x1x116xf32>
    %3 = vector.shape_cast %2 : vector<8x1x116xf32> to vector<8x116xf32>
    %4 = arith.addf %1, %3 : vector<8x116xf32>
    %c0_4 = arith.constant 0 : index
    %c2 = arith.constant 2 : index
    %c0_5 = arith.constant 0 : index
    %5 = vector.load %arg4[%c0_4, %c2, %c0_5] : memref<8x8x116xf32, #tpu.memory_space<vmem>>, vector<8x1x116xf32>
    %6 = vector.shape_cast %5 : vector<8x1x116xf32> to vector<8x116xf32>
    %7 = arith.addf %4, %6 : vector<8x116xf32>
    %c0_6 = arith.constant 0 : index
    %c3 = arith.constant 3 : index
    %c0_7 = arith.constant 0 : index
    %8 = vector.load %arg4[%c0_6, %c3, %c0_7] : memref<8x8x116xf32, #tpu.memory_space<vmem>>, vector<8x1x116xf32>
    %9 = vector.shape_cast %8 : vector<8x1x116xf32> to vector<8x116xf32>
    %10 = arith.addf %7, %9 : vector<8x116xf32>
    %c0_8 = arith.constant 0 : index
    %c4 = arith.constant 4 : index
    %c0_9 = arith.constant 0 : index
    %11 = vector.load %arg4[%c0_8, %c4, %c0_9] : memref<8x8x116xf32, #tpu.memory_space<vmem>>, vector<8x1x116xf32>
    %12 = vector.shape_cast %11 : vector<8x1x116xf32> to vector<8x116xf32>
    %13 = arith.addf %10, %12 : vector<8x116xf32>
    %c0_10 = arith.constant 0 : index
    %c5 = arith.constant 5 : index
    %c0_11 = arith.constant 0 : index
    %14 = vector.load %arg4[%c0_10, %c5, %c0_11] : memref<8x8x116xf32, #tpu.memory_space<vmem>>, vector<8x1x116xf32>
    %15 = vector.shape_cast %14 : vector<8x1x116xf32> to vector<8x116xf32>
    %16 = arith.addf %13, %15 : vector<8x116xf32>
    %c0_12 = arith.constant 0 : index
    %c6 = arith.constant 6 : index
    %c0_13 = arith.constant 0 : index
    %17 = vector.load %arg4[%c0_12, %c6, %c0_13] : memref<8x8x116xf32, #tpu.memory_space<vmem>>, vector<8x1x116xf32>
    %18 = vector.shape_cast %17 : vector<8x1x116xf32> to vector<8x116xf32>
    %19 = arith.addf %16, %18 : vector<8x116xf32>
    %c0_14 = arith.constant 0 : index
    %c7 = arith.constant 7 : index
    %c0_15 = arith.constant 0 : index
    %20 = vector.load %arg4[%c0_14, %c7, %c0_15] : memref<8x8x116xf32, #tpu.memory_space<vmem>>, vector<8x1x116xf32>
    %21 = vector.shape_cast %20 : vector<8x1x116xf32> to vector<8x116xf32>
    %22 = arith.addf %19, %21 : vector<8x116xf32>
    %c0_16 = arith.constant 0 : index
    %c0_17 = arith.constant 0 : index
    %23 = vector.load %arg2[%c0_16, %c0_17] : memref<8x192xf32, #tpu.memory_space<vmem>>, vector<8x192xf32>
    %c0_18 = arith.constant 0 : index
    %c0_19 = arith.constant 0 : index
    %24 = vector.load %arg5[%c0_18, %c0_19] : memref<192x32xf32, #tpu.memory_space<vmem>>, vector<192x32xf32>
    %cst = arith.constant dense<0.000000e+00> : vector<8x32xf32>
    %25 = tpu.matmul %23, %24, %cst {dimension_numbers = #tpu.dot_dimension_numbers<[1], [0], [0], [1], [0, 0, 1, 1], [], []>} : vector<8x192xf32>, vector<192x32xf32>, vector<8x32xf32> -> vector<8x32xf32>
    %c0_20 = arith.constant 0 : index
    %c0_21 = arith.constant 0 : index
    %26 = vector.load %arg1[%c0_20, %c0_21] : memref<8x3xf32, #tpu.memory_space<vmem>>, vector<8x3xf32>
    %c0_22 = arith.constant 0 : index
    %c0_23 = arith.constant 0 : index
    %27 = vector.load %arg6[%c0_22, %c0_23] : memref<3x32xf32, #tpu.memory_space<vmem>>, vector<3x32xf32>
    %cst_24 = arith.constant dense<0.000000e+00> : vector<8x32xf32>
    %28 = tpu.matmul %26, %27, %cst_24 {dimension_numbers = #tpu.dot_dimension_numbers<[1], [0], [0], [1], [0, 0, 1, 1], [], []>} : vector<8x3xf32>, vector<3x32xf32>, vector<8x32xf32> -> vector<8x32xf32>
    %29 = arith.addf %25, %28 : vector<8x32xf32>
    %c0_25 = arith.constant 0 : index
    %c0_26 = arith.constant 0 : index
    %30 = vector.load %arg7[%c0_25, %c0_26] : memref<1x32xf32, #tpu.memory_space<vmem>>, vector<1x32xf32>
    %31 = vector.broadcast %30 : vector<1x32xf32> to vector<8x32xf32>
    %32 = arith.addf %29, %31 : vector<8x32xf32>
    %c0_27 = arith.constant 0 : index
    %c0_28 = arith.constant 0 : index
    %33 = vector.load %arg8[%c0_27, %c0_28] : memref<116x32xf32, #tpu.memory_space<vmem>>, vector<116x32xf32>
    %cst_29 = arith.constant dense<0.000000e+00> : vector<8x32xf32>
    %34 = tpu.matmul %22, %33, %cst_29 {dimension_numbers = #tpu.dot_dimension_numbers<[1], [0], [0], [1], [0, 0, 1, 1], [], []>} : vector<8x116xf32>, vector<116x32xf32>, vector<8x32xf32> -> vector<8x32xf32>
    %c0_30 = arith.constant 0 : index
    %c0_31 = arith.constant 0 : index
    %35 = vector.load %arg9[%c0_30, %c0_31] : memref<1x32xf32, #tpu.memory_space<vmem>>, vector<1x32xf32>
    %36 = vector.broadcast %35 : vector<1x32xf32> to vector<8x32xf32>
    %37 = arith.addf %34, %36 : vector<8x32xf32>
    %c0_32 = arith.constant 0 : index
    %c0_33 = arith.constant 0 : index
    %38 = vector.load %arg3[%c0_32, %c0_33] : memref<8x32xf32, #tpu.memory_space<vmem>>, vector<8x32xf32>
    %39 = arith.mulf %38, %32 : vector<8x32xf32>
    %cst_34 = arith.constant 1.000000e+00 : f32
    %40 = vector.broadcast %cst_34 : f32 to vector<8x32xf32>
    %41 = arith.subf %40, %38 : vector<8x32xf32>
    %42 = arith.mulf %41, %37 : vector<8x32xf32>
    %43 = arith.addf %39, %42 : vector<8x32xf32>
    %c0_35 = arith.constant 0 : index
    %c0_36 = arith.constant 0 : index
    %44 = vector.load %arg10[%c0_35, %c0_36] : memref<2x32xf32, #tpu.memory_space<vmem>>, vector<2x32xf32>
    %45 = tpu.transpose %43, [1, 0] : vector<8x32xf32> -> vector<32x8xf32>
    %cst_37 = arith.constant dense<0.000000e+00> : vector<2x8xf32>
    %46 = tpu.matmul %44, %45, %cst_37 {dimension_numbers = #tpu.dot_dimension_numbers<[1], [0], [0], [1], [0, 0, 1, 1], [], []>} : vector<2x32xf32>, vector<32x8xf32>, vector<2x8xf32> -> vector<2x8xf32>
    %c0_38 = arith.constant 0 : index
    %c0_39 = arith.constant 0 : index
    %47 = vector.load %arg11[%c0_38, %c0_39] : memref<2x1xf32, #tpu.memory_space<vmem>>, vector<2x1xf32>
    %48 = vector.broadcast %47 : vector<2x1xf32> to vector<2x8xf32>
    %49 = arith.addf %46, %48 : vector<2x8xf32>
    %c0_40 = arith.constant 0 : index
    %c0_41 = arith.constant 0 : index
    %50 = vector.load %arg12[%c0_40, %c0_41] : memref<2x8xf32, #tpu.memory_space<vmem>>, vector<2x8xf32>
    tpu.vector_store %arg12[%c0_40, %c0_41], %49 {strides = array<i32>} : memref<2x8xf32, #tpu.memory_space<vmem>>, vector<2x8xf32>,
    return
  }
  func.func @transform_0(%arg0: i32) -> (i32, i32) {
    %c0_i32 = arith.constant 0 : i32
    %c0_i32_0 = arith.constant 0 : i32
    return %arg0, %c0_i32 : i32, i32
  }
  func.func @transform_1(%arg0: i32) -> (i32, i32) {
    %c0_i32 = arith.constant 0 : i32
    %c0_i32_0 = arith.constant 0 : i32
    return %arg0, %c0_i32 : i32, i32
  }
  func.func @transform_2(%arg0: i32) -> (i32, i32) {
    %c0_i32 = arith.constant 0 : i32
    %c0_i32_0 = arith.constant 0 : i32
    return %arg0, %c0_i32 : i32, i32
  }
  func.func @transform_3(%arg0: i32) -> (i32, i32, i32) {
    %c0_i32 = arith.constant 0 : i32
    %c0_i32_0 = arith.constant 0 : i32
    %c0_i32_1 = arith.constant 0 : i32
    return %arg0, %c0_i32, %c0_i32_0 : i32, i32, i32
  }
  func.func @transform_4(%arg0: i32) -> (i32, i32) {
    %c0_i32 = arith.constant 0 : i32
    %c0_i32_0 = arith.constant 0 : i32
    %c0_i32_1 = arith.constant 0 : i32
    return %c0_i32, %c0_i32_0 : i32, i32
  }
  func.func @transform_5(%arg0: i32) -> (i32, i32) {
    %c0_i32 = arith.constant 0 : i32
    %c0_i32_0 = arith.constant 0 : i32
    %c0_i32_1 = arith.constant 0 : i32
    return %c0_i32, %c0_i32_0 : i32, i32
  }
  func.func @transform_6(%arg0: i32) -> (i32, i32) {
    %c0_i32 = arith.constant 0 : i32
    %c0_i32_0 = arith.constant 0 : i32
    %c0_i32_1 = arith.constant 0 : i32
    return %c0_i32, %c0_i32_0 : i32, i32
  }
  func.func @transform_7(%arg0: i32) -> (i32, i32) {
    %c0_i32 = arith.constant 0 : i32
    %c0_i32_0 = arith.constant 0 : i32
    %c0_i32_1 = arith.constant 0 : i32
    return %c0_i32, %c0_i32_0 : i32, i32
  }
  func.func @transform_8(%arg0: i32) -> (i32, i32) {
    %c0_i32 = arith.constant 0 : i32
    %c0_i32_0 = arith.constant 0 : i32
    %c0_i32_1 = arith.constant 0 : i32
    return %c0_i32, %c0_i32_0 : i32, i32
  }
  func.func @transform_9(%arg0: i32) -> (i32, i32) {
    %c0_i32 = arith.constant 0 : i32
    %c0_i32_0 = arith.constant 0 : i32
    %c0_i32_1 = arith.constant 0 : i32
    return %c0_i32, %c0_i32_0 : i32, i32
  }
  func.func @transform_10(%arg0: i32) -> (i32, i32) {
    %c0_i32 = arith.constant 0 : i32
    %c0_i32_0 = arith.constant 0 : i32
    %c0_i32_1 = arith.constant 0 : i32
    return %c0_i32, %c0_i32_0 : i32, i32
  }
  func.func @transform_11(%arg0: i32) -> (i32, i32) {
    %c0_i32 = arith.constant 0 : i32
    %c0_i32_0 = arith.constant 0 : i32
    return %c0_i32, %arg0 : i32, i32
  }
}

</mosaic_0001>

<llo_original>
// kernel: transformer2_forward.1
$region0: #{transformer2_forward.1}
  #allocation0 [shape = 'u32[]', space=smem, size = 0x4, offset = 0x4, fixed_abs, tag = 'smem constant byte address 0x4 - core index']
  #allocation1 [shape = 'u32[144,128]{1,0:T(1,128)}', space=vmem, size = 0x12000, scoped, tag = 'internal scratch']
  %s0 = inlined_call_operand.vmem [shape: f32[8,3], index: 0, kind: input, shape index: {}]
  %s1 = inlined_call_operand.vmem [shape: f32[8,192], index: 1, kind: input, shape index: {}]
  %s2 = inlined_call_operand.vmem [shape: f32[8,32], index: 2, kind: input, shape index: {}]
  %s3 = inlined_call_operand.vmem [shape: f32[8,8,116], index: 3, kind: input, shape index: {}]
  %s4 = inlined_call_operand.vmem [shape: f32[192,32], index: 4, kind: input, shape index: {}]
  %s5 = inlined_call_operand.vmem [shape: f32[3,32], index: 5, kind: input, shape index: {}]
  %s6 = inlined_call_operand.vmem [shape: f32[1,32], index: 6, kind: input, shape index: {}]
  %s7 = inlined_call_operand.vmem [shape: f32[116,32], index: 7, kind: input, shape index: {}]
  %s8 = inlined_call_operand.vmem [shape: f32[1,32], index: 8, kind: input, shape index: {}]
  %s9 = inlined_call_operand.vmem [shape: f32[2,32], index: 9, kind: input, shape index: {}]
  %s10 = inlined_call_operand.vmem [shape: f32[2,1], index: 10, kind: input, shape index: {}]
  %s11 = inlined_call_operand.hbm [shape: f32[2,8], index: 11, kind: output, shape index: {}]
  %s12 = sld [smem:[#allocation0]]
  $region54: #{transformer2_forward.1} parent=0
    _
  %s14 = ssub.s32 1, %s12
  %s15 = scalar_select 0, %s14, %s12
  $region1: #{transformer2_forward.1} parent=0
    #allocation2 [shape = 'u8[1024]{0}', space=vmem, size = 0x400, scoped, tag = 'output window, operand 0, single buffered']
    #allocation3 [shape = 's32[1]{0}', space=sflag, size = 0x4, scoped, tag = 'scoped memory for transformer2_forward.1']
    %16 = vsyncpa [#allocation3], 0
    // Predicated region
    $region2: #{transformer2_forward.1} parent=1 // pred_check
      _
    $region3: #{transformer2_forward.1} parent=1 // pred_check_branch
      %18 = sbr.rel (0) target = $region5
    $region4: #{transformer2_forward.1} parent=1 // pred_region
      _
    $region5: #{transformer2_forward.1} parent=1 // pred_fallthru
      _
    // Predicated region
    $region6: #{transformer2_forward.1} parent=1 // pred_check
      _
    $region7: #{transformer2_forward.1} parent=1 // pred_check_branch
      %20 = sbr.rel (0) target = $region9
    $region8: #{transformer2_forward.1} parent=1 // pred_region
      _
    $region9: #{transformer2_forward.1} parent=1 // pred_fallthru
      _
    // Predicated region
    $region10: #{transformer2_forward.1} parent=1 // pred_check
      _
    $region11: #{transformer2_forward.1} parent=1 // pred_check_branch
      %22 = sbr.rel (0) target = $region13
    $region12: #{transformer2_forward.1} parent=1 // pred_region
      _
    $region13: #{transformer2_forward.1} parent=1 // pred_fallthru
      _
    // Predicated region
    $region14: #{transformer2_forward.1} parent=1 // pred_check
      _
    $region15: #{transformer2_forward.1} parent=1 // pred_check_branch
      %24 = sbr.rel (0) target = $region17
    $region16: #{transformer2_forward.1} parent=1 // pred_region
      _
    $region17: #{transformer2_forward.1} parent=1 // pred_fallthru
      _
    // Predicated region
    $region18: #{transformer2_forward.1} parent=1 // pred_check
      _
    $region19: #{transformer2_forward.1} parent=1 // pred_check_branch
      %26 = sbr.rel (0) target = $region21
    $region20: #{transformer2_forward.1} parent=1 // pred_region
      _
    $region21: #{transformer2_forward.1} parent=1 // pred_fallthru
      _
    // Predicated region
    $region22: #{transformer2_forward.1} parent=1 // pred_check
      _
    $region23: #{transformer2_forward.1} parent=1 // pred_check_branch
      %28 = sbr.rel (0) target = $region25
    $region24: #{transformer2_forward.1} parent=1 // pred_region
      _
    $region25: #{transformer2_forward.1} parent=1 // pred_fallthru
      _
    // Predicated region
    $region26: #{transformer2_forward.1} parent=1 // pred_check
      _
    $region27: #{transformer2_forward.1} parent=1 // pred_check_branch
      %30 = sbr.rel (0) target = $region29
    $region28: #{transformer2_forward.1} parent=1 // pred_region
      _
    $region29: #{transformer2_forward.1} parent=1 // pred_fallthru
      _
    // Predicated region
    $region30: #{transformer2_forward.1} parent=1 // pred_check
      _
    $region31: #{transformer2_forward.1} parent=1 // pred_check_branch
      %32 = sbr.rel (0) target = $region33
    $region32: #{transformer2_forward.1} parent=1 // pred_region
      _
    $region33: #{transformer2_forward.1} parent=1 // pred_fallthru
      _
    // Predicated region
    $region34: #{transformer2_forward.1} parent=1 // pred_check
      _
    $region35: #{transformer2_forward.1} parent=1 // pred_check_branch
      %34 = sbr.rel (0) target = $region37
    $region36: #{transformer2_forward.1} parent=1 // pred_region
      _
    $region37: #{transformer2_forward.1} parent=1 // pred_fallthru
      _
    // Predicated region
    $region38: #{transformer2_forward.1} parent=1 // pred_check
      _
    $region39: #{transformer2_forward.1} parent=1 // pred_check_branch
      %36 = sbr.rel (0) target = $region41
    $region40: #{transformer2_forward.1} parent=1 // pred_region
      _
    $region41: #{transformer2_forward.1} parent=1 // pred_fallthru
      _
    // Predicated region
    $region42: #{transformer2_forward.1} parent=1 // pred_check
      _
    $region43: #{transformer2_forward.1} parent=1 // pred_check_branch
      %38 = sbr.rel (0) target = $region45
    $region44: #{transformer2_forward.1} parent=1 // pred_region
      _
    $region45: #{transformer2_forward.1} parent=1 // pred_fallthru
      _
    %v39 = vld [vmem:[%s3] sm:$0x1]
    %v40 = vld [vmem:[%s3 + $0x8] sm:$0x1]
    %v41 = vld [vmem:[%s3 + $0x10] sm:$0x1]
    %v42 = vld [vmem:[%s3 + $0x18] sm:$0x1]
    %v43 = vld [vmem:[%s3 + $0x20] sm:$0x1]
    %v44 = vld [vmem:[%s3 + $0x28] sm:$0x1]
    %v45 = vld [vmem:[%s3 + $0x30] sm:$0x1]
    %v46 = vld [vmem:[%s3 + $0x38] sm:$0x1]
    %v47 = vld [vmem:[%s3 + $0x1] sm:$0x1]
    %v48 = vld [vmem:[%s3 + $0x9] sm:$0x1]
    %v49 = vld [vmem:[%s3 + $0x11] sm:$0x1]
    %v50 = vld [vmem:[%s3 + $0x19] sm:$0x1]
    %v51 = vld [vmem:[%s3 + $0x21] sm:$0x1]
    %v52 = vld [vmem:[%s3 + $0x29] sm:$0x1]
    %v53 = vld [vmem:[%s3 + $0x31] sm:$0x1]
    %v54 = vld [vmem:[%s3 + $0x39] sm:$0x1]
    %v55 = vadd.f32 %v39, %v47
    %v56 = vadd.f32 %v40, %v48
    %v57 = vadd.f32 %v41, %v49
    %v58 = vadd.f32 %v42, %v50
    %v59 = vadd.f32 %v43, %v51
    %v60 = vadd.f32 %v44, %v52
    %v61 = vadd.f32 %v45, %v53
    %v62 = vadd.f32 %v46, %v54
    %v63 = vld [vmem:[%s3 + $0x2] sm:$0x1]
    %v64 = vld [vmem:[%s3 + $0xa] sm:$0x1]
    %v65 = vld [vmem:[%s3 + $0x12] sm:$0x1]
    %v66 = vld [vmem:[%s3 + $0x1a] sm:$0x1]
    %v67 = vld [vmem:[%s3 + $0x22] sm:$0x1]
    %v68 = vld [vmem:[%s3 + $0x2a] sm:$0x1]
    %v69 = vld [vmem:[%s3 + $0x32] sm:$0x1]
    %v70 = vld [vmem:[%s3 + $0x3a] sm:$0x1]
    %v71 = vadd.f32 %v55, %v63
    %v72 = vadd.f32 %v56, %v64
    %v73 = vadd.f32 %v57, %v65
    %v74 = vadd.f32 %v58, %v66
    %v75 = vadd.f32 %v59, %v67
    %v76 = vadd.f32 %v60, %v68
    %v77 = vadd.f32 %v61, %v69
    %v78 = vadd.f32 %v62, %v70
    %v79 = vld [vmem:[%s3 + $0x3] sm:$0x1]
    %v80 = vld [vmem:[%s3 + $0xb] sm:$0x1]
    %v81 = vld [vmem:[%s3 + $0x13] sm:$0x1]
    %v82 = vld [vmem:[%s3 + $0x1b] sm:$0x1]
    %v83 = vld [vmem:[%s3 + $0x23] sm:$0x1]
    %v84 = vld [vmem:[%s3 + $0x2b] sm:$0x1]
    %v85 = vld [vmem:[%s3 + $0x33] sm:$0x1]
    %v86 = vld [vmem:[%s3 + $0x3b] sm:$0x1]
    %v87 = vadd.f32 %v71, %v79
    %v88 = vadd.f32 %v72, %v80
    %v89 = vadd.f32 %v73, %v81
    %v90 = vadd.f32 %v74, %v82
    %v91 = vadd.f32 %v75, %v83
    %v92 = vadd.f32 %v76, %v84
    %v93 = vadd.f32 %v77, %v85
    %v94 = vadd.f32 %v78, %v86
    %v95 = vld [vmem:[%s3 + $0x4] sm:$0x1]
    %v96 = vld [vmem:[%s3 + $0xc] sm:$0x1]
    %v97 = vld [vmem:[%s3 + $0x14] sm:$0x1]
    %v98 = vld [vmem:[%s3 + $0x1c] sm:$0x1]
    %v99 = vld [vmem:[%s3 + $0x24] sm:$0x1]
    %v100 = vld [vmem:[%s3 + $0x2c] sm:$0x1]
    %v101 = vld [vmem:[%s3 + $0x34] sm:$0x1]
    %v102 = vld [vmem:[%s3 + $0x3c] sm:$0x1]
    %v103 = vadd.f32 %v87, %v95
    %v104 = vadd.f32 %v88, %v96
    %v105 = vadd.f32 %v89, %v97
    %v106 = vadd.f32 %v90, %v98
    %v107 = vadd.f32 %v91, %v99
    %v108 = vadd.f32 %v92, %v100
    %v109 = vadd.f32 %v93, %v101
    %v110 = vadd.f32 %v94, %v102
    %v111 = vld [vmem:[%s3 + $0x5] sm:$0x1]
    %v112 = vld [vmem:[%s3 + $0xd] sm:$0x1]
    %v113 = vld [vmem:[%s3 + $0x15] sm:$0x1]
    %v114 = vld [vmem:[%s3 + $0x1d] sm:$0x1]
    %v115 = vld [vmem:[%s3 + $0x25] sm:$0x1]
    %v116 = vld [vmem:[%s3 + $0x2d] sm:$0x1]
    %v117 = vld [vmem:[%s3 + $0x35] sm:$0x1]
    %v118 = vld [vmem:[%s3 + $0x3d] sm:$0x1]
    %v119 = vadd.f32 %v103, %v111
    %v120 = vadd.f32 %v104, %v112
    %v121 = vadd.f32 %v105, %v113
    %v122 = vadd.f32 %v106, %v114
    %v123 = vadd.f32 %v107, %v115
    %v124 = vadd.f32 %v108, %v116
    %v125 = vadd.f32 %v109, %v117
    %v126 = vadd.f32 %v110, %v118
    %v127 = vld [vmem:[%s3 + $0x6] sm:$0x1]
    %v128 = vld [vmem:[%s3 + $0xe] sm:$0x1]
    %v129 = vld [vmem:[%s3 + $0x16] sm:$0x1]
    %v130 = vld [vmem:[%s3 + $0x1e] sm:$0x1]
    %v131 = vld [vmem:[%s3 + $0x26] sm:$0x1]
    %v132 = vld [vmem:[%s3 + $0x2e] sm:$0x1]
    %v133 = vld [vmem:[%s3 + $0x36] sm:$0x1]
    %v134 = vld [vmem:[%s3 + $0x3e] sm:$0x1]
    %v135 = vadd.f32 %v119, %v127
    %v136 = vadd.f32 %v120, %v128
    %v137 = vadd.f32 %v121, %v129
    %v138 = vadd.f32 %v122, %v130
    %v139 = vadd.f32 %v123, %v131
    %v140 = vadd.f32 %v124, %v132
    %v141 = vadd.f32 %v125, %v133
    %v142 = vadd.f32 %v126, %v134
    %v143 = vld [vmem:[%s3 + $0x7] sm:$0x1]
    %v144 = vld [vmem:[%s3 + $0xf] sm:$0x1]
    %v145 = vld [vmem:[%s3 + $0x17] sm:$0x1]
    %v146 = vld [vmem:[%s3 + $0x1f] sm:$0x1]
    %v147 = vld [vmem:[%s3 + $0x27] sm:$0x1]
    %v148 = vld [vmem:[%s3 + $0x2f] sm:$0x1]
    %v149 = vld [vmem:[%s3 + $0x37] sm:$0x1]
    %v150 = vld [vmem:[%s3 + $0x3f] sm:$0x1]
    %v151 = vadd.f32 %v135, %v143
    %v152 = vadd.f32 %v136, %v144
    %v153 = vadd.f32 %v137, %v145
    %v154 = vadd.f32 %v138, %v146
    %v155 = vadd.f32 %v139, %v147
    %v156 = vadd.f32 %v140, %v148
    %v157 = vadd.f32 %v141, %v149
    %v158 = vadd.f32 %v142, %v150
    %v159 = vld [vmem:[%s1] sm:$0xff]
    %v160 = vld [vmem:[%s1 + $0x8] sm:$0xff]
    %v161 = vld [vmem:[%s4] sm:$0xff]
    %v162 = vld [vmem:[%s4 + $0x8] sm:$0xff]
    %v163 = vld [vmem:[%s4 + $0x10] sm:$0xff]
    %v164 = vld [vmem:[%s4 + $0x18] sm:$0xff]
    %v165 = vld [vmem:[%s4 + $0x20] sm:$0xff]
    %v166 = vld [vmem:[%s4 + $0x28] sm:$0xff]
    %v167 = vld [vmem:[%s4 + $0x30] sm:$0xff]
    %v168 = vld [vmem:[%s4 + $0x38] sm:$0xff]
    %v169 = vld [vmem:[%s4 + $0x40] sm:$0xff]
    %v170 = vld [vmem:[%s4 + $0x48] sm:$0xff]
    %v171 = vld [vmem:[%s4 + $0x50] sm:$0xff]
    %v172 = vld [vmem:[%s4 + $0x58] sm:$0xff]
    %v173 = vld [vmem:[%s4 + $0x60] sm:$0xff]
    %v174 = vld [vmem:[%s4 + $0x68] sm:$0xff]
    %v175 = vld [vmem:[%s4 + $0x70] sm:$0xff]
    %v176 = vld [vmem:[%s4 + $0x78] sm:$0xff]
    %v177 = vld [vmem:[%s4 + $0x80] sm:$0xff]
    %v178 = vld [vmem:[%s4 + $0x88] sm:$0xff]
    %v179 = vld [vmem:[%s4 + $0x90] sm:$0xff]
    %v180 = vld [vmem:[%s4 + $0x98] sm:$0xff]
    %v181 = vld [vmem:[%s4 + $0xa0] sm:$0xff]
    %v182 = vld [vmem:[%s4 + $0xa8] sm:$0xff]
    %v183 = vld [vmem:[%s4 + $0xb0] sm:$0xff]
    %v184 = vld [vmem:[%s4 + $0xb8] sm:$0xff]
    %v185 = vld [vmem:[%s0] sm:$0xff]
    %v186 = vld [vmem:[%s5] sm:$0x7]
    %vm187 = vcmask 23552
    %v189 = vsel %vm187, %v185, 0
    %vm191 = vcmask 1042432
    %v193 = vsel %vm191, %v186, 0
    %195 = vmatprep.subr.mxu0 0.0
    %196 = vmatpush1.msra.mxu0 %v193
    %197 = vmatprep.subr.mxu0 0.0
    %198 = vmatpush1.msra.mxu0 0.0
    %199 = vmatprep.subr.mxu0 0.0
    %200 = vmatpush1.msra.mxu0 0.0
    %201 = vmatprep.subr.mxu0 0.0
    %202 = vmatpush1.msra.mxu0 0.0
    %203 = vmatprep.subr.mxu0 0.0
    %204 = vmatpush1.msra.mxu0 0.0
    %205 = vmatprep.subr.mxu0 0.0
    %206 = vmatpush1.msra.mxu0 0.0
    %207 = vmatprep.subr.mxu0 0.0
    %208 = vmatpush1.msra.mxu0 0.0
    %209 = vmatprep.subr.mxu0 0.0
    %210 = vmatpush1.msra.mxu0 0.0
    %211 = vmatprep.subr.mxu0 0.0
    %212 = vmatpush1.msra.mxu0 0.0
    %213 = vmatprep.subr.mxu0 0.0
    %214 = vmatpush1.msra.mxu0 0.0
    %215 = vmatprep.subr.mxu0 0.0
    %216 = vmatpush1.msra.mxu0 0.0
    %217 = vmatprep.subr.mxu0 0.0
    %218 = vmatpush1.msra.mxu0 0.0
    %219 = vmatprep.subr.mxu0 0.0
    %220 = vmatpush1.msra.mxu0 0.0
    %221 = vmatprep.subr.mxu0 0.0
    %222 = vmatpush1.msra.mxu0 0.0
    %223 = vmatprep.subr.mxu0 0.0
    %224 = vmatpush1.msra.mxu0 0.0
    %225 = vmatprep.subr.mxu0 0.0
    %226 = vmatpush1.msra.mxu0 0.0
    %227 = vmatprep.subr.mxu0 0.0
    %228 = vmatpush1.msra.mxu0 0.0
    %229 = vmatprep.subr.mxu0 0.0
    %230 = vmatpush1.msra.mxu0 0.0
    %231 = vmatprep.subr.mxu0 0.0
    %232 = vmatpush1.msra.mxu0 0.0
    %233 = vmatprep.subr.mxu0 0.0
    %234 = vmatpush1.msra.mxu0 0.0
    %235 = vmatprep.subr.mxu0 0.0
    %236 = vmatpush1.msra.mxu0 0.0
    %237 = vmatprep.subr.mxu0 0.0
    %238 = vmatpush1.msra.mxu0 0.0
    %239 = vmatprep.subr.mxu0 0.0
    %240 = vmatpush1.msra.mxu0 0.0
    %241 = vmatprep.subr.mxu0 0.0
    %242 = vmatpush1.msra.mxu0 0.0
    %243 = vmatprep.subr.mxu0 0.0
    %244 = vmatpush1.msra.mxu0 0.0
    %245 = vmatprep.subr.mxu0 0.0
    %246 = vmatpush1.msra.mxu0 0.0
    %247 = vmatprep.subr.mxu0 0.0
    %248 = vmatpush1.msra.mxu0 0.0
    %249 = vmatprep.subr.mxu0 0.0
    %250 = vmatpush1.msra.mxu0 0.0
    %251 = vmatprep.subr.mxu0 0.0
    %252 = vmatpush1.msra.mxu0 0.0
    %253 = vmatprep.subr.mxu0 0.0
    %254 = vmatpush1.msra.mxu0 0.0
    %255 = vmatprep.subr.mxu0 0.0
    %256 = vmatpush1.msra.mxu0 0.0
    %257 = vmatprep.subr.mxu0 0.0
    %258 = vmatpush1.msra.mxu0 0.0
    %259 = vmatprep.mubr.f32.mxu0 0.0
    %260 = vmatmul.mubr.f32.gmra.mrb[0].mxu0 %v189
    %v261 = vpop.f32.mrb[0].mxu0
    %v262 = vadd.f32 0.0, %v261
    %v263 = vpop.f32.mrb[0].mxu0
    %264 = vdwg.mxu0
    %vm265 = vcmask 523264
    %v267 = vsel %vm265, %v160, 0
    %269 = vmatprep.subr.mxu0 0.0
    %270 = vmatpush1.msra.mxu0 %v161
    %271 = vmatprep.subr.mxu0 0.0
    %272 = vmatpush1.msra.mxu0 %v162
    %273 = vmatprep.subr.mxu0 0.0
    %274 = vmatpush1.msra.mxu0 %v163
    %275 = vmatprep.subr.mxu0 0.0
    %276 = vmatpush1.msra.mxu0 %v164
    %277 = vmatprep.subr.mxu0 0.0
    %278 = vmatpush1.msra.mxu0 %v165
    %279 = vmatprep.subr.mxu0 0.0
    %280 = vmatpush1.msra.mxu0 %v166
    %281 = vmatprep.subr.mxu0 0.0
    %282 = vmatpush1.msra.mxu0 %v167
    %283 = vmatprep.subr.mxu0 0.0
    %284 = vmatpush1.msra.mxu0 %v168
    %285 = vmatprep.subr.mxu0 0.0
    %286 = vmatpush1.msra.mxu0 %v169
    %287 = vmatprep.subr.mxu0 0.0
    %288 = vmatpush1.msra.mxu0 %v170
    %289 = vmatprep.subr.mxu0 0.0
    %290 = vmatpush1.msra.mxu0 %v171
    %291 = vmatprep.subr.mxu0 0.0
    %292 = vmatpush1.msra.mxu0 %v172
    %293 = vmatprep.subr.mxu0 0.0
    %294 = vmatpush1.msra.mxu0 %v173
    %295 = vmatprep.subr.mxu0 0.0
    %296 = vmatpush1.msra.mxu0 %v174
    %297 = vmatprep.subr.mxu0 0.0
    %298 = vmatpush1.msra.mxu0 %v175
    %299 = vmatprep.subr.mxu0 0.0
    %300 = vmatpush1.msra.mxu0 %v176
    %301 = vmatprep.subr.mxu0 0.0
    %302 = vmatpush1.msra.mxu0 %v177
    %303 = vmatprep.subr.mxu0 0.0
    %304 = vmatpush1.msra.mxu0 %v178
    %305 = vmatprep.subr.mxu0 0.0
    %306 = vmatpush1.msra.mxu0 %v179
    %307 = vmatprep.subr.mxu0 0.0
    %308 = vmatpush1.msra.mxu0 %v180
    %309 = vmatprep.subr.mxu0 0.0
    %310 = vmatpush1.msra.mxu0 %v181
    %311 = vmatprep.subr.mxu0 0.0
    %312 = vmatpush1.msra.mxu0 %v182
    %313 = vmatprep.subr.mxu0 0.0
    %314 = vmatpush1.msra.mxu0 %v183
    %315 = vmatprep.subr.mxu0 0.0
    %316 = vmatpush1.msra.mxu0 %v184
    %317 = vmatprep.subr.mxu0 0.0
    %318 = vmatpush1.msra.mxu0 0.0
    %319 = vmatprep.subr.mxu0 0.0
    %320 = vmatpush1.msra.mxu0 0.0
    %321 = vmatprep.subr.mxu0 0.0
    %322 = vmatpush1.msra.mxu0 0.0
    %323 = vmatprep.subr.mxu0 0.0
    %324 = vmatpush1.msra.mxu0 0.0
    %325 = vmatprep.subr.mxu0 0.0
    %326 = vmatpush1.msra.mxu0 0.0
    %327 = vmatprep.subr.mxu0 0.0
    %328 = vmatpush1.msra.mxu0 0.0
    %329 = vmatprep.subr.mxu0 0.0
    %330 = vmatpush1.msra.mxu0 0.0
    %331 = vmatprep.subr.mxu0 0.0
    %332 = vmatpush1.msra.mxu0 0.0
    %333 = vmatprep.mubr.f32.mxu0 %v267
    %334 = vmatmul.mubr.f32.gmra.mrb[0].mxu0 %v159
    %v335 = vpop.f32.mrb[0].mxu0
    %v336 = vadd.f32 %v262, %v335
    %v337 = vpop.f32.mrb[0].mxu0
    %338 = vdwg.mxu0
    %v339 = vld [vmem:[%s6] sm:$0x1]
    %v341 = vlaneseq
    %v342 = vshrl.u32 %v341, 7
    %v343 = vsub.s32 0, %v342
    %v344 = vrot.slane %v339, %v343
    %v346 = vadd.f32 %v336, %v344
    %v347 = vld [vmem:[%s7] sm:$0xff]
    %v348 = vld [vmem:[%s7 + $0x8] sm:$0xff]
    %v349 = vld [vmem:[%s7 + $0x10] sm:$0xff]
    %v350 = vld [vmem:[%s7 + $0x18] sm:$0xff]
    %v351 = vld [vmem:[%s7 + $0x20] sm:$0xff]
    %v352 = vld [vmem:[%s7 + $0x28] sm:$0xff]
    %v353 = vld [vmem:[%s7 + $0x30] sm:$0xff]
    %v354 = vld [vmem:[%s7 + $0x38] sm:$0xff]
    %v355 = vld [vmem:[%s7 + $0x40] sm:$0xff]
    %v356 = vld [vmem:[%s7 + $0x48] sm:$0xff]
    %v357 = vld [vmem:[%s7 + $0x50] sm:$0xff]
    %v358 = vld [vmem:[%s7 + $0x58] sm:$0xff]
    %v359 = vld [vmem:[%s7 + $0x60] sm:$0xff]
    %v360 = vld [vmem:[%s7 + $0x68] sm:$0xff]
    %v361 = vld [vmem:[%s7 + $0x70] sm:$0xf]
    %v362 = vld [vmem:[%s8] sm:$0x1]
    %v364 = vlaneseq
    %v365 = vshrl.u32 %v364, 7
    %v366 = vsub.s32 0, %v365
    %v367 = vrot.slane %v362, %v366
    %v377 = vrot.slane %v152, 7
    %vm378 = vcmask 1041409
    %v379 = vsel %vm378, %v377, %v151
    %v380 = vrot.slane %v153, 6
    %vm381 = vcmask 1042434
    %v382 = vsel %vm381, %v380, %v379
    %v383 = vrot.slane %v154, 5
    %vm384 = vcmask 1043459
    %v385 = vsel %vm384, %v383, %v382
    %v386 = vrot.slane %v155, 4
    %vm387 = vcmask 1044484
    %v388 = vsel %vm387, %v386, %v385
    %v389 = vrot.slane %v156, 3
    %vm390 = vcmask 1045509
    %v391 = vsel %vm390, %v389, %v388
    %v392 = vrot.slane %v157, 2
    %vm393 = vcmask 1046534
    %v394 = vsel %vm393, %v392, %v391
    %v395 = vrot.slane %v158, 1
    %vm396 = vcmask 1047559
    %v397 = vsel %vm396, %v395, %v394
    %vm398 = vcmask 949248
    %v399 = vsel %vm398, %v397, 0
    %vm401 = vcmask 1043456
    %v403 = vsel %vm401, %v361, 0
    %405 = vmatprep.subr.mxu0 0.0
    %406 = vmatpush1.msra.mxu0 %v347
    %407 = vmatprep.subr.mxu0 0.0
    %408 = vmatpush1.msra.mxu0 %v348
    %409 = vmatprep.subr.mxu0 0.0
    %410 = vmatpush1.msra.mxu0 %v349
    %411 = vmatprep.subr.mxu0 0.0
    %412 = vmatpush1.msra.mxu0 %v350
    %413 = vmatprep.subr.mxu0 0.0
    %414 = vmatpush1.msra.mxu0 %v351
    %415 = vmatprep.subr.mxu0 0.0
    %416 = vmatpush1.msra.mxu0 %v352
    %417 = vmatprep.subr.mxu0 0.0
    %418 = vmatpush1.msra.mxu0 %v353
    %419 = vmatprep.subr.mxu0 0.0
    %420 = vmatpush1.msra.mxu0 %v354
    %421 = vmatprep.subr.mxu0 0.0
    %422 = vmatpush1.msra.mxu0 %v355
    %423 = vmatprep.subr.mxu0 0.0
    %424 = vmatpush1.msra.mxu0 %v356
    %425 = vmatprep.subr.mxu0 0.0
    %426 = vmatpush1.msra.mxu0 %v357
    %427 = vmatprep.subr.mxu0 0.0
    %428 = vmatpush1.msra.mxu0 %v358
    %429 = vmatprep.subr.mxu0 0.0
    %430 = vmatpush1.msra.mxu0 %v359
    %431 = vmatprep.subr.mxu0 0.0
    %432 = vmatpush1.msra.mxu0 %v360
    %433 = vmatprep.subr.mxu0 0.0
    %434 = vmatpush1.msra.mxu0 %v403
    %435 = vmatprep.subr.mxu0 0.0
    %436 = vmatpush1.msra.mxu0 0.0
    %437 = vmatprep.subr.mxu0 0.0
    %438 = vmatpush1.msra.mxu0 0.0
    %439 = vmatprep.subr.mxu0 0.0
    %440 = vmatpush1.msra.mxu0 0.0
    %441 = vmatprep.subr.mxu0 0.0
    %442 = vmatpush1.msra.mxu0 0.0
    %443 = vmatprep.subr.mxu0 0.0
    %444 = vmatpush1.msra.mxu0 0.0
    %445 = vmatprep.subr.mxu0 0.0
    %446 = vmatpush1.msra.mxu0 0.0
    %447 = vmatprep.subr.mxu0 0.0
    %448 = vmatpush1.msra.mxu0 0.0
    %449 = vmatprep.subr.mxu0 0.0
    %450 = vmatpush1.msra.mxu0 0.0
    %451 = vmatprep.subr.mxu0 0.0
    %452 = vmatpush1.msra.mxu0 0.0
    %453 = vmatprep.subr.mxu0 0.0
    %454 = vmatpush1.msra.mxu0 0.0
    %455 = vmatprep.subr.mxu0 0.0
    %456 = vmatpush1.msra.mxu0 0.0
    %457 = vmatprep.subr.mxu0 0.0
    %458 = vmatpush1.msra.mxu0 0.0
    %459 = vmatprep.subr.mxu0 0.0
    %460 = vmatpush1.msra.mxu0 0.0
    %461 = vmatprep.subr.mxu0 0.0
    %462 = vmatpush1.msra.mxu0 0.0
    %463 = vmatprep.subr.mxu0 0.0
    %464 = vmatpush1.msra.mxu0 0.0
    %465 = vmatprep.subr.mxu0 0.0
    %466 = vmatpush1.msra.mxu0 0.0
    %467 = vmatprep.subr.mxu0 0.0
    %468 = vmatpush1.msra.mxu0 0.0
    %469 = vmatprep.mubr.f32.mxu0 0.0
    %470 = vmatmul.mubr.f32.gmra.mrb[0].mxu0 %v399
    %v471 = vpop.f32.mrb[0].mxu0
    %v472 = vadd.f32 %v367, %v471
    %v473 = vpop.f32.mrb[0].mxu0
    %474 = vdwg.mxu0
    %v475 = vld [vmem:[%s2] sm:$0xff]
    %v476 = vmul.f32 %v475, %v346
    %v477 = vsub.f32 1.0, %v475
    %v478 = vmul.f32 %v477, %v472
    %v479 = vadd.f32 %v476, %v478
    %v480 = vld [vmem:[%s9] sm:$0x3]
    %v481 = vld [vmem:[%s10] sm:$0x3]
    %483 = vset.pattern.permute.xlu0 0
    %484 = vperm.xlu0 %483, %v481
    %v485 = vpop.permute.xlu0 %484
    %vm487 = vcmask 261120
    %v489 = vsel %vm487, %v480, 0
    %v492 = vsel %vm487, %v479, 0
    %494 = vmatprep.subr.mxu0 0.0
    %495 = vmatpush1.xpose.msra.mxu0 %v492
    %496 = vmatprep.subr.mxu0 0.0
    %497 = vmatpush1.xpose.msra.mxu0 0.0
    %498 = vmatprep.subr.mxu0 0.0
    %499 = vmatpush1.xpose.msra.mxu0 0.0
    %500 = vmatprep.subr.mxu0 0.0
    %501 = vmatpush1.xpose.msra.mxu0 0.0
    %502 = vmatprep.subr.mxu0 0.0
    %503 = vmatpush1.xpose.msra.mxu0 0.0
    %504 = vmatprep.subr.mxu0 0.0
    %505 = vmatpush1.xpose.msra.mxu0 0.0
    %506 = vmatprep.subr.mxu0 0.0
    %507 = vmatpush1.xpose.msra.mxu0 0.0
    %508 = vmatprep.subr.mxu0 0.0
    %509 = vmatpush1.xpose.msra.mxu0 0.0
    %510 = vmatprep.subr.mxu0 0.0
    %511 = vmatpush1.xpose.msra.mxu0 0.0
    %512 = vmatprep.subr.mxu0 0.0
    %513 = vmatpush1.xpose.msra.mxu0 0.0
    %514 = vmatprep.subr.mxu0 0.0
    %515 = vmatpush1.xpose.msra.mxu0 0.0
    %516 = vmatprep.subr.mxu0 0.0
    %517 = vmatpush1.xpose.msra.mxu0 0.0
    %518 = vmatprep.subr.mxu0 0.0
    %519 = vmatpush1.xpose.msra.mxu0 0.0
    %520 = vmatprep.subr.mxu0 0.0
    %521 = vmatpush1.xpose.msra.mxu0 0.0
    %522 = vmatprep.subr.mxu0 0.0
    %523 = vmatpush1.xpose.msra.mxu0 0.0
    %524 = vmatprep.subr.mxu0 0.0
    %525 = vmatpush1.xpose.msra.mxu0 0.0
    %526 = vmatprep.subr.mxu0 0.0
    %527 = vmatpush1.xpose.msra.mxu0 0.0
    %528 = vmatprep.subr.mxu0 0.0
    %529 = vmatpush1.xpose.msra.mxu0 0.0
    %530 = vmatprep.subr.mxu0 0.0
    %531 = vmatpush1.xpose.msra.mxu0 0.0
    %532 = vmatprep.subr.mxu0 0.0
    %533 = vmatpush1.xpose.msra.mxu0 0.0
    %534 = vmatprep.subr.mxu0 0.0
    %535 = vmatpush1.xpose.msra.mxu0 0.0
    %536 = vmatprep.subr.mxu0 0.0
    %537 = vmatpush1.xpose.msra.mxu0 0.0
    %538 = vmatprep.subr.mxu0 0.0
    %539 = vmatpush1.xpose.msra.mxu0 0.0
    %540 = vmatprep.subr.mxu0 0.0
    %541 = vmatpush1.xpose.msra.mxu0 0.0
    %542 = vmatprep.subr.mxu0 0.0
    %543 = vmatpush1.xpose.msra.mxu0 0.0
    %544 = vmatprep.subr.mxu0 0.0
    %545 = vmatpush1.xpose.msra.mxu0 0.0
    %546 = vmatprep.subr.mxu0 0.0
    %547 = vmatpush1.xpose.msra.mxu0 0.0
    %548 = vmatprep.subr.mxu0 0.0
    %549 = vmatpush1.xpose.msra.mxu0 0.0
    %550 = vmatprep.subr.mxu0 0.0
    %551 = vmatpush1.xpose.msra.mxu0 0.0
    %552 = vmatprep.subr.mxu0 0.0
    %553 = vmatpush1.xpose.msra.mxu0 0.0
    %554 = vmatprep.subr.mxu0 0.0
    %555 = vmatpush1.xpose.msra.mxu0 0.0
    %556 = vmatprep.subr.mxu0 0.0
    %557 = vmatpush1.xpose.msra.mxu0 0.0
    %558 = vmatprep.mubr.f32.mxu0 0.0
    %559 = vmatmul.mubr.f32.gmra.mrb[0].mxu0 %v489
    %v560 = vpop.f32.mrb[0].mxu0
    %v561 = vadd.f32 %v485, %v560
    %v562 = vpop.f32.mrb[0].mxu0
    %563 = vdwg.mxu0
    %vm564 = vcmask 58368
    %565 = vst.msk [vmem:[#allocation2] sm:$0x3] %vm564, %v561
    // Predicated region
    $region46: #{transformer2_forward.1} parent=1 // pred_check
      _
    $region47: #{transformer2_forward.1} parent=1 // pred_check_branch
      %567 = sbr.rel (0) target = $region49
    $region48: #{transformer2_forward.1} parent=1 // pred_region
      %s569 = ssub.s32 32, 32
      %570 = vsyncadd [#allocation3], %s569
      %s572 = sshll.u32 [#allocation2], 4
      %s573 = int_to_ptr.vmem [resolvable:$true] %s572
      %575 = dma.vmem_to_hbm [thread:$0]  %s573, 32, %s11, [#allocation3]
    $region49: #{transformer2_forward.1} parent=1 // pred_fallthru
      _
    // Predicated region
    $region50: #{transformer2_forward.1} parent=1 // pred_check
      _
    $region51: #{transformer2_forward.1} parent=1 // pred_check_branch
      %577 = sbr.rel (0) target = $region53
    $region52: #{transformer2_forward.1} parent=1 // pred_region
      %578 = dma.done [#allocation3], 32
    $region53: #{transformer2_forward.1} parent=1 // pred_fallthru
      _
    %579 = vsyncpa [#allocation3], 1

</llo_original>
